<compile_context>
chip_gen: v5e
topology: v5e:2x2
jax: 0.10.0
libtpu: 0.0.40
codegen_flags: <defaults>
</compile_context>

<pallas_src>
import functools

import jax
import jax.numpy as jnp
from jax.experimental import pallas as pl
from jax.experimental.pallas import tpu as pltpu


def _round_up(n, m):
    return ((n + m - 1) // m) * m


# ----------------------------------------------------------------------------- kernel ---

def _make_actor_kernel(input_size, in_pad, hid_pad, output_size):
    """Kernel over one (tm, input_size) batch tile with packed weight/bias slabs."""

    def kernel(x_ref, w_ref, b_ref, o_ref):
        cdtype = w_ref.dtype                      # f32 or bf16 (MXU input dtype)
        x = x_ref[...].astype(cdtype)             # (tm, input_size); no-op cast for f32

        # Static slices into the packed weight slab (row offsets are 128-multiples).
        # Only the first input_size rows of W1 are read (x is unpadded); W2/W3's
        # zero-padded rows/cols keep the lane-padded hidden activations exactly 0.
        w1 = w_ref[pl.ds(0, input_size), pl.ds(0, hid_pad)]                  # (in,      hid_pad)
        w2 = w_ref[pl.ds(in_pad, hid_pad), pl.ds(0, hid_pad)]                # (hid_pad, hid_pad)
        w3 = w_ref[pl.ds(in_pad + hid_pad, hid_pad), pl.ds(0, output_size)]  # (hid_pad, out)

        b1 = b_ref[pl.ds(0, 1), pl.ds(0, hid_pad)]                           # (1, hid_pad) f32
        b2 = b_ref[pl.ds(1, 1), pl.ds(0, hid_pad)]
        b3 = b_ref[pl.ds(2, 1), pl.ds(0, output_size)]                       # (1, out)     f32

        # Matmuls accumulate in f32 on the MXU; bias-add / tanh stay f32 on VPU/EUP.
        h1 = jnp.tanh(jnp.dot(x, w1, preferred_element_type=jnp.float32) + b1)
        h2 = jnp.tanh(jnp.dot(h1.astype(cdtype), w2, preferred_element_type=jnp.float32) + b2)
        y = jnp.tanh(jnp.dot(h2.astype(cdtype), w3, preferred_element_type=jnp.float32) + b3)
        o_ref[...] = y.astype(o_ref.dtype)        # true-width (tm, output_size) store

    return kernel


# ----------------------------------------------------------------- one-time param packing ---

def pack_actor_params(w1, b1, w2, b2, w3, b3, *, compute_dtype=jnp.float32):
    """Pack the 3 weight matrices into one lane-dense slab and the 3 biases into one
    (8, 128k) slab. Call ONCE at init / param update — not in the per-call forward path."""
    input_size, hidden_size = w1.shape
    output_size = w3.shape[1]
    in_pad = _round_up(input_size, 128)
    hid_pad = _round_up(hidden_size, 128)
    out_pad = _round_up(output_size, 128)
    col_pad = max(hid_pad, out_pad)

    def pad2(a, rows, cols):
        return jnp.pad(a, ((0, rows - a.shape[0]), (0, cols - a.shape[1])))

    w_slab = jnp.concatenate(
        [pad2(w1, in_pad, col_pad), pad2(w2, hid_pad, col_pad), pad2(w3, hid_pad, col_pad)],
        axis=0,
    ).astype(compute_dtype)                               # (in_pad + 2*hid_pad, col_pad)

    b_slab = jnp.zeros((8, col_pad), jnp.float32)         # biases always f32
    b_slab = b_slab.at[0, :hidden_size].set(b1.astype(jnp.float32))
    b_slab = b_slab.at[1, :hidden_size].set(b2.astype(jnp.float32))
    b_slab = b_slab.at[2, :output_size].set(b3.astype(jnp.float32))
    return w_slab, b_slab


# -------------------------------------------------------------------------------- forward ---

@functools.partial(jax.jit, static_argnames=("hidden_size", "output_size", "block_batch"))
def actor_forward(x, w_slab, b_slab, *, hidden_size, output_size, block_batch=1024):
    batch, input_size = x.shape
    in_pad = _round_up(input_size, 128)
    hid_pad = _round_up(hidden_size, 128)
    slab_rows, col_pad = w_slab.shape             # == (in_pad + 2*hid_pad, >=128 multiple)

    # Batch tile: always a multiple of 8 sublanes (robust to arbitrary block_batch).
    tm_cap = max(8, _round_up(block_batch, 8))
    b8 = _round_up(batch, 8)
    if b8 <= tm_cap:
        # Whole batch fits one tile. For big batches split into 2 grid steps so the
        # "parallel" batch axis can be sharded across v7x's two TensorCores.
        tm = _round_up((batch + 1) // 2, 8) if batch > 256 else b8
    else:
        tm = tm_cap
    b_padded = _round_up(batch, tm)
    grid_steps = b_padded // tm

    if b_padded != batch:                         # row-pad only when actually needed
        x = jnp.pad(x, ((0, b_padded - batch), (0, 0)))

    kernel = _make_actor_kernel(input_size, in_pad, hid_pad, output_size)

    out = pl.pallas_call(
        kernel,
        out_shape=jax.ShapeDtypeStruct((b_padded, output_size), jnp.float32),
        grid=(grid_steps,),
        in_specs=[
            # Unpadded activations, batch-tiled (last dim == full array dim -> legal).
            pl.BlockSpec((tm, input_size), lambda i: (i, 0)),
            # Packed weight / bias slabs: constant index_map -> VMEM-resident, no re-DMA.
            pl.BlockSpec((slab_rows, col_pad), lambda i: (0, 0)),
            pl.BlockSpec((8, col_pad), lambda i: (0, 0)),
        ],
        # True-width output block (last dim == full array dim) — no padded HBM writes,
        # no wrapper column slice.
        out_specs=pl.BlockSpec((tm, output_size), lambda i: (i, 0)),
        compiler_params=pltpu.CompilerParams(
            dimension_semantics=("parallel",),    # v7x: shard batch across the 2 TCs
        ),
    )(x, w_slab, b_slab)

    return out if b_padded == batch else out[:batch]


# ----------------------------------------------------------------------------------- init ---

def init_params(key, input_size, hidden_size, output_size):
    k1, k2, k3 = jax.random.split(key, 3)
    # Matches the spec's explicit init: weight.data.normal_(0, 1), bias.data.zero_().
    # Weights stored as (in, out) (transposed vs. PyTorch) so the kernel does x @ W.
    w1 = jax.random.normal(k1, (input_size, hidden_size), jnp.float32)
    b1 = jnp.zeros((hidden_size,), jnp.float32)
    w2 = jax.random.normal(k2, (hidden_size, hidden_size), jnp.float32)
    b2 = jnp.zeros((hidden_size,), jnp.float32)
    w3 = jax.random.normal(k3, (hidden_size, output_size), jnp.float32)
    b3 = jnp.zeros((output_size,), jnp.float32)
    return w1, b1, w2, b2, w3, b3


if __name__ == "__main__":
    input_size, hidden_size, output_size = 16, 32, 8
    batch = 8

    key = jax.random.PRNGKey(0)
    kx, kp = jax.random.split(key)
    x = jax.random.normal(kx, (batch, input_size), jnp.float32)
    w1, b1, w2, b2, w3, b3 = init_params(kp, input_size, hidden_size, output_size)

    # Pure-JAX reference.
    ref = jnp.tanh(jnp.tanh(jnp.tanh(x @ w1 + b1) @ w2 + b2) @ w3 + b3)

    # --- f32 path (default) ---------------------------------------------------------
    w_slab, b_slab = pack_actor_params(w1, b1, w2, b2, w3, b3)          # packed ONCE
    out = actor_forward(x, w_slab, b_slab,
                        hidden_size=hidden_size, output_size=output_size)
    jax.block_until_ready(out)
    assert out.shape == (batch, output_size)
    assert jnp.allclose(out, ref, atol=1e-5, rtol=1e-5), float(jnp.max(jnp.abs(out - ref)))

    # --- optional bf16-weight path (v6e/v7x DMA/MXU-friendly; loose sanity check) ----
    w_slab_bf, b_slab_bf = pack_actor_params(
        w1, b1, w2, b2, w3, b3, compute_dtype=jnp.bfloat16)
    out_bf = actor_forward(x, w_slab_bf, b_slab_bf,
                           hidden_size=hidden_size, output_size=output_size)
    jax.block_until_ready(out_bf)
    assert out_bf.shape == (batch, output_size)
    assert bool(jnp.all(jnp.isfinite(out_bf)))
    assert jnp.allclose(out_bf, ref, atol=0.25), float(jnp.max(jnp.abs(out_bf - ref)))

    print("KERNEL_OK")
</pallas_src>

<mosaic_0001>
module attributes {stable_mosaic.version = 11 : i64} {
  func.func @kernel(%arg0: i32, %arg1: memref<8x16xf32, #tpu.memory_space<vmem>>, %arg2: memref<384x128xf32, #tpu.memory_space<vmem>>, %arg3: memref<8x128xf32, #tpu.memory_space<vmem>>, %arg4: memref<8x8xf32, #tpu.memory_space<vmem>>) attributes {dimension_semantics = [#tpu.dimension_semantics<parallel>], iteration_bounds = array<i64: 1>, scalar_prefetch = 0 : i64, scratch_operands = 0 : i64, tpu.core_type = #tpu.core_type<tc>, window_params = [{transform_indices = @transform_0, window_bounds = array<i64: 8, 16>}, {pipeline_mode = #tpu.pipeline_mode<synchronous>, transform_indices = @transform_1, window_bounds = array<i64: 384, 128>}, {pipeline_mode = #tpu.pipeline_mode<synchronous>, transform_indices = @transform_2, window_bounds = array<i64: 8, 128>}, {transform_indices = @transform_3, window_bounds = array<i64: 8, 8>}]} {
    %c0 = arith.constant 0 : index
    %c0_0 = arith.constant 0 : index
    %0 = vector.load %arg1[%c0, %c0_0] : memref<8x16xf32, #tpu.memory_space<vmem>>, vector<8x16xf32>
    %c0_1 = arith.constant 0 : index
    %c0_2 = arith.constant 0 : index
    %1 = vector.load %arg2[%c0_1, %c0_2] : memref<384x128xf32, #tpu.memory_space<vmem>>, vector<16x128xf32>
    %c128 = arith.constant 128 : index
    %c0_3 = arith.constant 0 : index
    %2 = vector.load %arg2[%c128, %c0_3] : memref<384x128xf32, #tpu.memory_space<vmem>>, vector<128x128xf32>
    %c256 = arith.constant 256 : index
    %c0_4 = arith.constant 0 : index
    %3 = vector.load %arg2[%c256, %c0_4] : memref<384x128xf32, #tpu.memory_space<vmem>>, vector<128x8xf32>
    %c0_5 = arith.constant 0 : index
    %c0_6 = arith.constant 0 : index
    %4 = vector.load %arg3[%c0_5, %c0_6] : memref<8x128xf32, #tpu.memory_space<vmem>>, vector<1x128xf32>
    %c1 = arith.constant 1 : index
    %c0_7 = arith.constant 0 : index
    %5 = vector.load %arg3[%c1, %c0_7] : memref<8x128xf32, #tpu.memory_space<vmem>>, vector<1x128xf32>
    %c2 = arith.constant 2 : index
    %c0_8 = arith.constant 0 : index
    %6 = vector.load %arg3[%c2, %c0_8] : memref<8x128xf32, #tpu.memory_space<vmem>>, vector<1x8xf32>
    %cst = arith.constant dense<0.000000e+00> : vector<8x128xf32>
    %7 = tpu.matmul %0, %1, %cst {dimension_numbers = #tpu.dot_dimension_numbers<[1], [0], [0], [1], [0, 0, 1, 1], [], []>} : vector<8x16xf32>, vector<16x128xf32>, vector<8x128xf32> -> vector<8x128xf32>
    %8 = vector.broadcast %4 : vector<1x128xf32> to vector<8x128xf32>
    %9 = arith.addf %7, %8 : vector<8x128xf32>
    %10 = math.tanh %9 : vector<8x128xf32>
    %cst_9 = arith.constant dense<0.000000e+00> : vector<8x128xf32>
    %11 = tpu.matmul %10, %2, %cst_9 {dimension_numbers = #tpu.dot_dimension_numbers<[1], [0], [0], [1], [0, 0, 1, 1], [], []>} : vector<8x128xf32>, vector<128x128xf32>, vector<8x128xf32> -> vector<8x128xf32>
    %12 = vector.broadcast %5 : vector<1x128xf32> to vector<8x128xf32>
    %13 = arith.addf %11, %12 : vector<8x128xf32>
    %14 = math.tanh %13 : vector<8x128xf32>
    %cst_10 = arith.constant dense<0.000000e+00> : vector<8x8xf32>
    %15 = tpu.matmul %14, %3, %cst_10 {dimension_numbers = #tpu.dot_dimension_numbers<[1], [0], [0], [1], [0, 0, 1, 1], [], []>} : vector<8x128xf32>, vector<128x8xf32>, vector<8x8xf32> -> vector<8x8xf32>
    %16 = vector.broadcast %6 : vector<1x8xf32> to vector<8x8xf32>
    %17 = arith.addf %15, %16 : vector<8x8xf32>
    %18 = math.tanh %17 : vector<8x8xf32>
    %c0_11 = arith.constant 0 : index
    %c0_12 = arith.constant 0 : index
    %19 = vector.load %arg4[%c0_11, %c0_12] : memref<8x8xf32, #tpu.memory_space<vmem>>, vector<8x8xf32>
    tpu.vector_store %arg4[%c0_11, %c0_12], %18 {strides = array<i32>} : memref<8x8xf32, #tpu.memory_space<vmem>>, vector<8x8xf32>,
    return
  }
  func.func @transform_0(%arg0: i32) -> (i32, i32) {
    %c0_i32 = arith.constant 0 : i32
    %c0_i32_0 = arith.constant 0 : i32
    return %arg0, %c0_i32 : i32, i32
  }
  func.func @transform_1(%arg0: i32) -> (i32, i32) {
    %c0_i32 = arith.constant 0 : i32
    %c0_i32_0 = arith.constant 0 : i32
    %c0_i32_1 = arith.constant 0 : i32
    return %c0_i32, %c0_i32_0 : i32, i32
  }
  func.func @transform_2(%arg0: i32) -> (i32, i32) {
    %c0_i32 = arith.constant 0 : i32
    %c0_i32_0 = arith.constant 0 : i32
    %c0_i32_1 = arith.constant 0 : i32
    return %c0_i32, %c0_i32_0 : i32, i32
  }
  func.func @transform_3(%arg0: i32) -> (i32, i32) {
    %c0_i32 = arith.constant 0 : i32
    %c0_i32_0 = arith.constant 0 : i32
    return %arg0, %c0_i32 : i32, i32
  }
}

</mosaic_0001>

<llo_original>
// kernel: actor_forward.1
$region0: #{actor_forward.1}
  #allocation0 [shape = 'u32[]', space=smem, size = 0x4, offset = 0x4, fixed_abs, tag = 'smem constant byte address 0x4 - core index']
  #allocation1 [shape = 'u32[72,128]{1,0:T(1,128)}', space=vmem, size = 0x9000, scoped, tag = 'internal scratch']
  %s0 = inlined_call_operand.hbm [shape: f32[8,16], index: 0, kind: input, shape index: {}]
  %s1 = inlined_call_operand.hbm [shape: f32[384,128], index: 1, kind: input, shape index: {}]
  %s2 = inlined_call_operand.hbm [shape: f32[8,128], index: 2, kind: input, shape index: {}]
  %s3 = inlined_call_operand.hbm [shape: f32[8,8], index: 3, kind: output, shape index: {}]
  %s4 = sld [smem:[#allocation0]]
  $region34: #{actor_forward.1} parent=0
    _
  %s6 = ssub.s32 1, %s4
  %s7 = scalar_select 0, %s6, %s4
  $region1: #{actor_forward.1} parent=0
    #allocation2 [shape = 'u8[4096]{0}', space=vmem, size = 0x1000, scoped, tag = 'input window, operand 0, single buffered']
    #allocation3 [shape = 's32[1]{0}', space=sflag, size = 0x4, scoped, tag = 'scoped memory for actor_forward.1']
    #allocation4 [shape = 's32[1]{0}', space=sflag, size = 0x4, scoped, tag = 'scoped memory for actor_forward.1']
    #allocation5 [shape = 'u8[196608]{0}', space=vmem, size = 0x30000, scoped, tag = 'input window, operand 1, single buffered']
    #allocation6 [shape = 's32[1]{0}', space=sflag, size = 0x4, scoped, tag = 'scoped memory for actor_forward.1']
    #allocation7 [shape = 'u8[4096]{0}', space=vmem, size = 0x1000, scoped, tag = 'input window, operand 2, single buffered']
    #allocation8 [shape = 'u8[4096]{0}', space=vmem, size = 0x1000, scoped, tag = 'output window, operand 0, single buffered']
    %8 = vsyncpa [#allocation3], 0
    %9 = vsyncpa [#allocation6], 0
    %10 = vsyncpa [#allocation4], 0
    // Predicated region
    $region2: #{actor_forward.1} parent=1 // pred_check
      _
    $region3: #{actor_forward.1} parent=1 // pred_check_branch
      %12 = sbr.rel (0) target = $region5
    $region4: #{actor_forward.1} parent=1 // pred_region
      %14 = vsyncadd [#allocation3], 0
      %s16 = sshll.u32 %s0, 4
      %s17 = int_to_ptr.hbm [resolvable:$true] %s16
      %s18 = sshll.u32 [#allocation2], 4
      %s19 = int_to_ptr.vmem [resolvable:$true] %s18
      %21 = dma.hbm_to_vmem [thread:$0]  %s17, 128, %s19, [#allocation3]
    $region5: #{actor_forward.1} parent=1 // pred_fallthru
      _
    // Predicated region
    $region6: #{actor_forward.1} parent=1 // pred_check
      _
    $region7: #{actor_forward.1} parent=1 // pred_check_branch
      %23 = sbr.rel (0) target = $region9
    $region8: #{actor_forward.1} parent=1 // pred_region
      %25 = vsyncadd [#allocation6], 0
      %s26 = sshll.u32 %s1, 4
      %s27 = int_to_ptr.hbm [resolvable:$true] %s26
      %s28 = sshll.u32 [#allocation5], 4
      %s29 = int_to_ptr.vmem [resolvable:$true] %s28
      %34 = dma.hbm_to_vmem [thread:$0]  %s27, 6144, %s29, [#allocation6], 128, 128, 8
    $region9: #{actor_forward.1} parent=1 // pred_fallthru
      _
    // Predicated region
    $region10: #{actor_forward.1} parent=1 // pred_check
      _
    $region11: #{actor_forward.1} parent=1 // pred_check_branch
      %36 = sbr.rel (0) target = $region13
    $region12: #{actor_forward.1} parent=1 // pred_region
      %38 = vsyncadd [#allocation6], 0
      %s40 = sshll.u32 %s2, 4
      %s41 = int_to_ptr.hbm [resolvable:$true] %s40
      %s42 = sshll.u32 [#allocation7], 4
      %s43 = int_to_ptr.vmem [resolvable:$true] %s42
      %45 = dma.hbm_to_vmem [thread:$0]  %s41, 128, %s43, [#allocation6]
    $region13: #{actor_forward.1} parent=1 // pred_fallthru
      _
    // Predicated region
    $region14: #{actor_forward.1} parent=1 // pred_check
      _
    $region15: #{actor_forward.1} parent=1 // pred_check_branch
      %47 = sbr.rel (0) target = $region17
    $region16: #{actor_forward.1} parent=1 // pred_region
      %49 = dma.done [#allocation3], 128
    $region17: #{actor_forward.1} parent=1 // pred_fallthru
      _
    // Predicated region
    $region18: #{actor_forward.1} parent=1 // pred_check
      _
    $region19: #{actor_forward.1} parent=1 // pred_check_branch
      %51 = sbr.rel (0) target = $region21
    $region20: #{actor_forward.1} parent=1 // pred_region
      %53 = dma.done [#allocation6], 6144
    $region21: #{actor_forward.1} parent=1 // pred_fallthru
      _
    // Predicated region
    $region22: #{actor_forward.1} parent=1 // pred_check
      _
    $region23: #{actor_forward.1} parent=1 // pred_check_branch
      %55 = sbr.rel (0) target = $region25
    $region24: #{actor_forward.1} parent=1 // pred_region
      %57 = dma.done [#allocation6], 128
    $region25: #{actor_forward.1} parent=1 // pred_fallthru
      _
    %v58 = vld [vmem:[#allocation2] sm:$0xff]
    %v59 = vld [vmem:[#allocation5] sm:$0xff]
    %v60 = vld [vmem:[#allocation5 + $0x8] sm:$0xff]
    %v61 = vld [vmem:[#allocation5 + $0x80] sm:$0xff]
    %v62 = vld [vmem:[#allocation5 + $0x88] sm:$0xff]
    %v63 = vld [vmem:[#allocation5 + $0x90] sm:$0xff]
    %v64 = vld [vmem:[#allocation5 + $0x98] sm:$0xff]
    %v65 = vld [vmem:[#allocation5 + $0xa0] sm:$0xff]
    %v66 = vld [vmem:[#allocation5 + $0xa8] sm:$0xff]
    %v67 = vld [vmem:[#allocation5 + $0xb0] sm:$0xff]
    %v68 = vld [vmem:[#allocation5 + $0xb8] sm:$0xff]
    %v69 = vld [vmem:[#allocation5 + $0xc0] sm:$0xff]
    %v70 = vld [vmem:[#allocation5 + $0xc8] sm:$0xff]
    %v71 = vld [vmem:[#allocation5 + $0xd0] sm:$0xff]
    %v72 = vld [vmem:[#allocation5 + $0xd8] sm:$0xff]
    %v73 = vld [vmem:[#allocation5 + $0xe0] sm:$0xff]
    %v74 = vld [vmem:[#allocation5 + $0xe8] sm:$0xff]
    %v75 = vld [vmem:[#allocation5 + $0xf0] sm:$0xff]
    %v76 = vld [vmem:[#allocation5 + $0xf8] sm:$0xff]
    %v77 = vld [vmem:[#allocation5 + $0x100] sm:$0xff]
    %v78 = vld [vmem:[#allocation5 + $0x108] sm:$0xff]
    %v79 = vld [vmem:[#allocation5 + $0x110] sm:$0xff]
    %v80 = vld [vmem:[#allocation5 + $0x118] sm:$0xff]
    %v81 = vld [vmem:[#allocation5 + $0x120] sm:$0xff]
    %v82 = vld [vmem:[#allocation5 + $0x128] sm:$0xff]
    %v83 = vld [vmem:[#allocation5 + $0x130] sm:$0xff]
    %v84 = vld [vmem:[#allocation5 + $0x138] sm:$0xff]
    %v85 = vld [vmem:[#allocation5 + $0x140] sm:$0xff]
    %v86 = vld [vmem:[#allocation5 + $0x148] sm:$0xff]
    %v87 = vld [vmem:[#allocation5 + $0x150] sm:$0xff]
    %v88 = vld [vmem:[#allocation5 + $0x158] sm:$0xff]
    %v89 = vld [vmem:[#allocation5 + $0x160] sm:$0xff]
    %v90 = vld [vmem:[#allocation5 + $0x168] sm:$0xff]
    %v91 = vld [vmem:[#allocation5 + $0x170] sm:$0xff]
    %v92 = vld [vmem:[#allocation5 + $0x178] sm:$0xff]
    %v93 = vld [vmem:[#allocation7] sm:$0x1]
    %v94 = vld [vmem:[#allocation7 + $0x1] sm:$0x1]
    %v95 = vld [vmem:[#allocation7 + $0x2] sm:$0x1]
    %v96 = vperm.slane %v93, 0
    %vm97 = vcmask 130048
    %v99 = vsel %vm97, %v58, 0
    %101 = vmatpush.msra.mxu0 0.0
    %102 = vmatpush.msra.mxu0 0.0
    %103 = vmatpush.msra.mxu0 0.0
    %104 = vmatpush.msra.mxu0 0.0
    %105 = vmatpush.msra.mxu0 0.0
    %106 = vmatpush.msra.mxu0 0.0
    %107 = vmatpush.msra.mxu0 0.0
    %108 = vmatpush.msra.mxu0 0.0
    %109 = vmatpush.msra.mxu0 0.0
    %110 = vmatpush.msra.mxu0 0.0
    %111 = vmatpush.msra.mxu0 0.0
    %112 = vmatpush.msra.mxu0 0.0
    %113 = vmatpush.msra.mxu0 0.0
    %114 = vmatpush.msra.mxu0 0.0
    %115 = vmatpush.msra.mxu0 %v60
    %116 = vmatpush.msra.mxu0 %v59
    %117 = vmatmul.f32.gmra.mxu0 %v99
    %v118 = vpop.f32.mrf.mxu0
    %v119 = vadd.f32 %v96, %v118
    %120 = vdwg.mxu0
    %v121 = vtanh.pop %v119
    %v122 = vperm.slane %v94, 0
    %123 = vmatpush.msra.mxu0 %v76
    %124 = vmatpush.msra.mxu0 %v75
    %125 = vmatpush.msra.mxu0 %v74
    %126 = vmatpush.msra.mxu0 %v73
    %127 = vmatpush.msra.mxu0 %v72
    %128 = vmatpush.msra.mxu0 %v71
    %129 = vmatpush.msra.mxu0 %v70
    %130 = vmatpush.msra.mxu0 %v69
    %131 = vmatpush.msra.mxu0 %v68
    %132 = vmatpush.msra.mxu0 %v67
    %133 = vmatpush.msra.mxu0 %v66
    %134 = vmatpush.msra.mxu0 %v65
    %135 = vmatpush.msra.mxu0 %v64
    %136 = vmatpush.msra.mxu0 %v63
    %137 = vmatpush.msra.mxu0 %v62
    %138 = vmatpush.msra.mxu0 %v61
    %139 = vmatmul.f32.gmra.mxu0 %v121
    %v140 = vpop.f32.mrf.mxu0
    %v141 = vadd.f32 %v122, %v140
    %142 = vdwg.mxu0
    %v143 = vtanh.pop %v141
    %v144 = vperm.slane %v95, 0
    %145 = vmatpush.msra.mxu0 %v92
    %146 = vmatpush.msra.mxu0 %v91
    %147 = vmatpush.msra.mxu0 %v90
    %148 = vmatpush.msra.mxu0 %v89
    %149 = vmatpush.msra.mxu0 %v88
    %150 = vmatpush.msra.mxu0 %v87
    %151 = vmatpush.msra.mxu0 %v86
    %152 = vmatpush.msra.mxu0 %v85
    %153 = vmatpush.msra.mxu0 %v84
    %154 = vmatpush.msra.mxu0 %v83
    %155 = vmatpush.msra.mxu0 %v82
    %156 = vmatpush.msra.mxu0 %v81
    %157 = vmatpush.msra.mxu0 %v80
    %158 = vmatpush.msra.mxu0 %v79
    %159 = vmatpush.msra.mxu0 %v78
    %160 = vmatpush.msra.mxu0 %v77
    %161 = vmatmul.f32.gmra.mxu0 %v143
    %v162 = vpop.f32.mrf.mxu0
    %v163 = vadd.f32 %v144, %v162
    %164 = vdwg.mxu0
    %v165 = vtanh.pop %v163
    %vm166 = vcmask 64512
    %167 = vst.msk [vmem:[#allocation8] sm:$0xff] %vm166, %v165
    // Predicated region
    $region26: #{actor_forward.1} parent=1 // pred_check
      _
    $region27: #{actor_forward.1} parent=1 // pred_check_branch
      %169 = sbr.rel (0) target = $region29
    $region28: #{actor_forward.1} parent=1 // pred_region
      %171 = vsyncadd [#allocation4], 0
      %s173 = sshll.u32 [#allocation8], 4
      %s174 = int_to_ptr.vmem [resolvable:$true] %s173
      %s175 = sshll.u32 %s3, 4
      %s176 = int_to_ptr.hbm [resolvable:$true] %s175
      %178 = dma.vmem_to_hbm [thread:$0]  %s174, 128, %s176, [#allocation4]
    $region29: #{actor_forward.1} parent=1 // pred_fallthru
      _
    // Predicated region
    $region30: #{actor_forward.1} parent=1 // pred_check
      _
    $region31: #{actor_forward.1} parent=1 // pred_check_branch
      %180 = sbr.rel (0) target = $region33
    $region32: #{actor_forward.1} parent=1 // pred_region
      %182 = dma.done [#allocation4], 128
    $region33: #{actor_forward.1} parent=1 // pred_fallthru
      _
    %183 = vsyncpa [#allocation3], 1
    %184 = vsyncpa [#allocation6], 1
    %185 = vsyncpa [#allocation4], 1

</llo_original>
